<compile_context>
chip_gen: v7x
topology: tpu7x:2x2x1
jax: 0.10.0
libtpu: 0.0.40
codegen_flags: <defaults>
</compile_context>

<pallas_src>
import functools

import jax
import jax.numpy as jnp
from jax import lax
from jax.experimental import pallas as pl
from jax.experimental.pallas import tpu as pltpu

EPS = 1e-5  # PyTorch InstanceNorm2d default eps.


def _residual_block_kernel(x_ref, w1_ref, w2_ref, o_ref, pad_ref, y_ref, *,
                           C, H, W, row_chunks, compute_dtype):
    """One batch element.
       x_ref, o_ref : (C, H*W)        lane-dense activations
       w*_ref       : (C, 9*C)        packed (ky, kx, c_in) conv weights
       pad_ref      : (3C, (H+2)*W)   resident reflect-padded tap planes
       y_ref        : (C, H*W)        resident pre-norm conv output (f32)
    """
    HW = H * W
    f32 = jnp.float32
    cdt = compute_dtype
    inv_hw = 1.0 / HW

    # Column-border masks, lane-only (1, chunk); broadcast over channels.
    max_sz = max(t for _, t in row_chunks) * W
    col = lax.broadcasted_iota(jnp.int32, (1, max_sz), 1) % W
    col0 = col == 0          # x == 0   -> reflect: use x+1
    colw = col == W - 1      # x == W-1 -> reflect: use x-1

    def build_pad(get_chunk):
        # Fill pad_ref with the dx=-1 / 0 / +1 tap values of the activation
        # delivered chunk-by-chunk by get_chunk(r0, th) (already in `cdt`).
        for r0, th in row_chunks:
            lo, sz = r0 * W, th * W
            v = get_chunk(r0, th)                         # (C, sz)
            l = pltpu.roll(v, 1, axis=1)                  # value at x-1
            r = pltpu.roll(v, sz - 1, axis=1)             # value at x+1
            left = jnp.where(col0[:, :sz], r, l)          # dx=-1 (reflect col 0)
            right = jnp.where(colw[:, :sz], l, r)         # dx=+1 (reflect col W-1)
            dst0 = W + lo                                 # padded-row offset (+1 row)
            pad_ref[0 * C:1 * C, dst0:dst0 + sz] = left
            pad_ref[1 * C:2 * C, dst0:dst0 + sz] = v
            pad_ref[2 * C:3 * C, dst0:dst0 + sz] = right
        # Reflection rows: padded row 0 <- input row 1; padded row H+1 <- H-2.
        pad_ref[:, 0:W] = pad_ref[:, 2 * W:3 * W]
        pad_ref[:, (H + 1) * W:(H + 2) * W] = pad_ref[:, (H - 1) * W:H * W]

    def conv(w_ref):
        # 3x3 conv of the activation held in pad_ref: per row chunk, three
        # accumulating MXU matmuls (one per row-tap group ky, K = 3C), each
        # consuming a static *view* of pad_ref (no im2col staging).  Pre-norm
        # f32 output is staged in y_ref; per-channel sum / sumsq returned.
        s = jnp.zeros((C, 1), f32)
        ss = jnp.zeros((C, 1), f32)
        for r0, th in row_chunks:
            lo, sz = r0 * W, th * W
            y = None
            for ky in range(3):
                wk = w_ref[:, ky * 3 * C:(ky + 1) * 3 * C]            # (C, 3C)
                band = pad_ref[:, (r0 + ky) * W:(r0 + ky) * W + sz]   # (3C, sz)
                d = jnp.dot(wk, band, preferred_element_type=f32)
                y = d if y is None else y + d
            y_ref[:, lo:lo + sz] = y
            s = s + jnp.sum(y, axis=1, keepdims=True)
            ss = ss + jnp.sum(y * y, axis=1, keepdims=True)
        return s, ss

    def norm_params(s, ss):
        # InstanceNorm2d (affine=False, biased variance).  The conv bias is
        # exactly cancelled by the mean subtraction and is never added.
        mean = s * inv_hw
        var = ss * inv_hw - mean * mean
        return mean, lax.rsqrt(var + EPS)

    # conv1: reflect-pad(x) -> conv -> InstanceNorm stats.
    build_pad(lambda r0, th: x_ref[:, r0 * W:(r0 + th) * W].astype(cdt))
    mean, scale = norm_params(*conv(w1_ref))

    # IN + ReLU, rebuilt as tap planes for conv2 (pad_ref reused in place).
    def h_chunk(r0, th):
        y = y_ref[:, r0 * W:(r0 + th) * W]
        return jnp.maximum((y - mean) * scale, 0.0).astype(cdt)
    build_pad(h_chunk)

    # conv2 -> InstanceNorm -> residual add (x re-read from x_ref, not kept live).
    mean, scale = norm_params(*conv(w2_ref))
    for r0, th in row_chunks:
        lo, sz = r0 * W, th * W
        z = (y_ref[:, lo:lo + sz] - mean) * scale
        xc = x_ref[:, lo:lo + sz].astype(f32)
        o_ref[:, lo:lo + sz] = (xc + z).astype(o_ref.dtype)


def _row_chunks(C, H, W, max_chunk_bytes=2 << 20):
    # Bound the transient f32 conv-output chunk (C x th x W) to ~2 MiB so
    # per-chunk temporaries stay small (v7x 64 MiB VMEM headroom); resident
    # scratches (tap planes + pre-norm staging) are sized once in the wrapper.
    th = max(1, min(H, max_chunk_bytes // max(1, C * W * 4)))
    chunks, r = [], 0
    while r < H:
        t = min(th, H - r)
        chunks.append((r, t))
        r += t
    return tuple(chunks)


def _vmem_limit_bytes():
    # Derive the scoped-VMEM limit from the actual chip (v5e/v6e: 128 MiB,
    # v7x: 64 MiB) with ~15% headroom for Mosaic internal scratch.
    cap = 128 << 20
    try:
        cap = int(pltpu.get_tpu_info().vmem_capacity_bytes)
    except Exception:
        pass
    return max(32 << 20, int(cap * 0.85))


def residual_block(x, w1, b1, w2, b2, *, compute_dtype=jnp.bfloat16):
    """x: (N, C, H, W); w*: (C, C, 3, 3); b*: (C,). Returns (N, C, H, W)."""
    N, C, H, W = x.shape
    HW = H * W
    # Biases are mathematically cancelled by the affine-less InstanceNorm that
    # immediately follows each conv, so they are not passed to the kernel.
    del b1, b2

    # Pack conv weights as (C_out, 9*C_in) ordered (ky, kx, c_in) so that the
    # ky-group slice [:, ky*3C:(ky+1)*3C] matches the (left, center, right)
    # row layout of the tap-plane scratch.  MXU compute dtype.
    # TODO(synk): optional fp8 compute_dtype path for v7x's MXU (per-channel
    # scaling likely needed); all norm/residual math stays f32 regardless.
    w1p = jnp.transpose(w1, (0, 2, 3, 1)).reshape(C, 9 * C).astype(compute_dtype)
    w2p = jnp.transpose(w2, (0, 2, 3, 1)).reshape(C, 9 * C).astype(compute_dtype)

    # Lane-dense activation layout: last dim = H*W maps to lanes (unmasked
    # vst/vld when W is a multiple of 128 at production sizes).
    x_flat = x.reshape(N, C, HW)

    row_chunks = _row_chunks(C, H, W)
    kernel = functools.partial(_residual_block_kernel, C=C, H=H, W=W,
                               row_chunks=row_chunks,
                               compute_dtype=compute_dtype)

    act_spec = pl.BlockSpec((pl.Squeezed(), C, HW), lambda n: (n, 0, 0))
    out_flat = pl.pallas_call(
        kernel,
        out_shape=jax.ShapeDtypeStruct((N, C, HW), x.dtype),
        grid_spec=pltpu.PrefetchScalarGridSpec(
            num_scalar_prefetch=0,
            grid=(N,),
            in_specs=[
                act_spec,
                # Grid-invariant weights: one untiled copy resident in VMEM.
                pl.BlockSpec(memory_space=pltpu.MemorySpace.VMEM),
                pl.BlockSpec(memory_space=pltpu.MemorySpace.VMEM),
            ],
            out_specs=pl.BlockSpec((pl.Squeezed(), C, HW), lambda n: (n, 0, 0)),
            scratch_shapes=[
                pltpu.VMEM((3 * C, (H + 2) * W), compute_dtype),  # tap planes
                pltpu.VMEM((C, HW), jnp.float32),                 # pre-norm staging
            ],
        ),
        compiler_params=pltpu.CompilerParams(
            dimension_semantics=("parallel",),
            vmem_limit_bytes=_vmem_limit_bytes(),
        ),
    )(x_flat, w1p, w2p)
    # TODO(synk): for N == 1 on v7x (2 TensorCores), add a parallel H-split
    # grid axis with cross-step InstanceNorm stats so both cores are fed.
    return out_flat.reshape(N, C, H, W)


def _reference(x, w1, b1, w2, b2):
    # Pure-JAX reference mirroring the PyTorch module (f32 everywhere).
    def conv_in(v, w, b):
        p = jnp.pad(v, ((0, 0), (0, 0), (1, 1), (1, 1)), mode="reflect")
        y = lax.conv_general_dilated(
            p, w, window_strides=(1, 1), padding="VALID",
            dimension_numbers=("NCHW", "OIHW", "NCHW"),
            precision=lax.Precision.HIGHEST)
        y = y + b[None, :, None, None]
        mean = jnp.mean(y, axis=(2, 3), keepdims=True)
        var = jnp.mean((y - mean) ** 2, axis=(2, 3), keepdims=True)
        return (y - mean) / jnp.sqrt(var + EPS)

    h = jnp.maximum(conv_in(x, w1, b1), 0.0)
    return x + conv_in(h, w2, b2)


if __name__ == "__main__":
    key = jax.random.PRNGKey(0)
    N, C, H, W = 2, 4, 16, 16
    kx, k1, k2, k3, k4 = jax.random.split(key, 5)

    x = jax.random.normal(kx, (N, C, H, W), dtype=jnp.float32)
    # Deterministic Conv2d-like uniform fan-in init.
    bound = 1.0 / (C * 3 * 3) ** 0.5
    w1 = jax.random.uniform(k1, (C, C, 3, 3), jnp.float32, -bound, bound)
    b1 = jax.random.uniform(k2, (C,), jnp.float32, -bound, bound)
    w2 = jax.random.uniform(k3, (C, C, 3, 3), jnp.float32, -bound, bound)
    b2 = jax.random.uniform(k4, (C,), jnp.float32, -bound, bound)

    ref = _reference(x, w1, b1, w2, b2)

    # Exact-precision path (f32 MXU operands): tight check vs the module.
    out_f32 = jax.block_until_ready(
        residual_block(x, w1, b1, w2, b2, compute_dtype=jnp.float32))
    assert out_f32.shape == (N, C, H, W)
    assert jnp.allclose(out_f32, ref, atol=1e-4, rtol=1e-4), "f32 path mismatch"

    # Production path (bf16 MXU operands, f32 accumulation + f32 norm math).
    out_bf16 = jax.block_until_ready(residual_block(x, w1, b1, w2, b2))
    rel = jnp.linalg.norm(out_bf16 - ref) / jnp.linalg.norm(ref)
    assert float(rel) < 3e-2, f"bf16 path relative error too high: {float(rel)}"

    print("KERNEL_OK")
</pallas_src>

<mosaic_0001>
module attributes {stable_mosaic.version = 11 : i64} {
  func.func @_residual_block_kernel(%arg0: i32, %arg1: memref<1x4x256xf32, #tpu.memory_space<vmem>>, %arg2: memref<4x36xf32, #tpu.memory_space<vmem>>, %arg3: memref<4x36xf32, #tpu.memory_space<vmem>>, %arg4: memref<1x4x256xf32, #tpu.memory_space<vmem>>, %arg5: memref<12x288xf32, #tpu.memory_space<vmem>>, %arg6: memref<4x256xf32, #tpu.memory_space<vmem>>) attributes {dimension_semantics = [#tpu.dimension_semantics<parallel>], iteration_bounds = array<i64: 2>, scalar_prefetch = 0 : i64, scratch_operands = 2 : i64, tpu.core_type = #tpu.core_type<tc>, window_params = [{transform_indices = @transform_0, window_bounds = array<i64: 1, 4, 256>}, {pipeline_mode = #tpu.pipeline_mode<synchronous>, transform_indices = @transform_1, window_bounds = array<i64: 4, 36>}, {pipeline_mode = #tpu.pipeline_mode<synchronous>, transform_indices = @transform_2, window_bounds = array<i64: 4, 36>}, {transform_indices = @transform_3, window_bounds = array<i64: 1, 4, 256>}]} {
    %0 = tpu.iota {dimensions = array<i32: 1>} : vector<1x256xi32>
    %c16_i32 = arith.constant 16 : i32
    %c0_i32 = arith.constant 0 : i32
    %1 = arith.cmpi eq, %c16_i32, %c0_i32 : i32
    %c1_i32 = arith.constant 1 : i32
    %2 = arith.select %1, %c1_i32, %c16_i32 : i32
    %3 = vector.broadcast %2 : i32 to vector<1x256xi32>
    %4 = arith.remsi %0, %3 : vector<1x256xi32>
    %c0_i32_0 = arith.constant 0 : i32
    %5 = vector.broadcast %c0_i32_0 : i32 to vector<1x256xi32>
    %6 = arith.cmpi ne, %4, %5 : vector<1x256xi32>
    %c0_i32_1 = arith.constant 0 : i32
    %7 = vector.broadcast %c0_i32_1 : i32 to vector<1x256xi32>
    %8 = arith.cmpi slt, %4, %7 : vector<1x256xi32>
    %c0_i32_2 = arith.constant 0 : i32
    %9 = arith.cmpi slt, %2, %c0_i32_2 : i32
    %10 = vector.broadcast %9 : i1 to vector<1x256xi1>
    %11 = vector.broadcast %10 : vector<1x256xi1> to vector<1x256xi1>
    %12 = arith.xori %8, %11 : vector<1x256xi1>
    %13 = arith.andi %12, %6 : vector<1x256xi1>
    %14 = vector.broadcast %2 : i32 to vector<1x256xi32>
    %15 = arith.addi %4, %14 : vector<1x256xi32>
    %16 = arith.select %13, %15, %4 : vector<1x256xi1>, vector<1x256xi32>
    %c0_i32_3 = arith.constant 0 : i32
    %17 = vector.broadcast %c0_i32_3 : i32 to vector<1x256xi32>
    %18 = arith.cmpi eq, %16, %17 : vector<1x256xi32>
    %c15_i32 = arith.constant 15 : i32
    %19 = vector.broadcast %c15_i32 : i32 to vector<1x256xi32>
    %20 = arith.cmpi eq, %16, %19 : vector<1x256xi32>
    %c0 = arith.constant 0 : index
    %c0_4 = arith.constant 0 : index
    %c0_5 = arith.constant 0 : index
    %21 = vector.load %arg1[%c0, %c0_4, %c0_5] : memref<1x4x256xf32, #tpu.memory_space<vmem>>, vector<1x4x256xf32>
    %22 = vector.shape_cast %21 : vector<1x4x256xf32> to vector<4x256xf32>
    %c1_i32_6 = arith.constant 1 : i32
    %23 = tpu.dynamic_rotate %22 by %c1_i32_6 dim 1 : vector<4x256xf32>, i32 -> vector<4x256xf32>
    %c255_i32 = arith.constant 255 : i32
    %24 = tpu.dynamic_rotate %22 by %c255_i32 dim 1 : vector<4x256xf32>, i32 -> vector<4x256xf32>
    %25 = vector.shape_cast %18 : vector<1x256xi1> to vector<1x256xi1>
    %26 = vector.broadcast %25 : vector<1x256xi1> to vector<4x256xi1>
    %27 = arith.select %26, %24, %23 : vector<4x256xi1>, vector<4x256xf32>
    %28 = vector.shape_cast %20 : vector<1x256xi1> to vector<1x256xi1>
    %29 = vector.broadcast %28 : vector<1x256xi1> to vector<4x256xi1>
    %30 = arith.select %29, %23, %24 : vector<4x256xi1>, vector<4x256xf32>
    %c0_7 = arith.constant 0 : index
    %c16 = arith.constant 16 : index
    %31 = vector.load %arg5[%c0_7, %c16] : memref<12x288xf32, #tpu.memory_space<vmem>>, vector<4x256xf32>
    tpu.vector_store %arg5[%c0_7, %c16], %27 {strides = array<i32>} : memref<12x288xf32, #tpu.memory_space<vmem>>, vector<4x256xf32>,
    %c4 = arith.constant 4 : index
    %c16_8 = arith.constant 16 : index
    %32 = vector.load %arg5[%c4, %c16_8] : memref<12x288xf32, #tpu.memory_space<vmem>>, vector<4x256xf32>
    tpu.vector_store %arg5[%c4, %c16_8], %22 {strides = array<i32>} : memref<12x288xf32, #tpu.memory_space<vmem>>, vector<4x256xf32>,
    %c8 = arith.constant 8 : index
    %c16_9 = arith.constant 16 : index
    %33 = vector.load %arg5[%c8, %c16_9] : memref<12x288xf32, #tpu.memory_space<vmem>>, vector<4x256xf32>
    tpu.vector_store %arg5[%c8, %c16_9], %30 {strides = array<i32>} : memref<12x288xf32, #tpu.memory_space<vmem>>, vector<4x256xf32>,
    %c0_10 = arith.constant 0 : index
    %c32 = arith.constant 32 : index
    %34 = vector.load %arg5[%c0_10, %c32] : memref<12x288xf32, #tpu.memory_space<vmem>>, vector<12x16xf32>
    %c0_11 = arith.constant 0 : index
    %c0_12 = arith.constant 0 : index
    %35 = vector.load %arg5[%c0_11, %c0_12] : memref<12x288xf32, #tpu.memory_space<vmem>>, vector<12x16xf32>
    tpu.vector_store %arg5[%c0_11, %c0_12], %34 {strides = array<i32>} : memref<12x288xf32, #tpu.memory_space<vmem>>, vector<12x16xf32>,
    %c0_13 = arith.constant 0 : index
    %c240 = arith.constant 240 : index
    %36 = vector.load %arg5[%c0_13, %c240] : memref<12x288xf32, #tpu.memory_space<vmem>>, vector<12x16xf32>
    %c0_14 = arith.constant 0 : index
    %c272 = arith.constant 272 : index
    %37 = vector.load %arg5[%c0_14, %c272] : memref<12x288xf32, #tpu.memory_space<vmem>>, vector<12x16xf32>
    tpu.vector_store %arg5[%c0_14, %c272], %36 {strides = array<i32>} : memref<12x288xf32, #tpu.memory_space<vmem>>, vector<12x16xf32>,
    %cst = arith.constant 0.000000e+00 : f32
    %38 = vector.broadcast %cst : f32 to vector<4x1xf32>
    %cst_15 = arith.constant 0.000000e+00 : f32
    %39 = vector.broadcast %cst_15 : f32 to vector<4x1xf32>
    %c0_16 = arith.constant 0 : index
    %c0_17 = arith.constant 0 : index
    %40 = vector.load %arg2[%c0_16, %c0_17] : memref<4x36xf32, #tpu.memory_space<vmem>>, vector<4x12xf32>
    %c0_18 = arith.constant 0 : index
    %c0_19 = arith.constant 0 : index
    %41 = vector.load %arg5[%c0_18, %c0_19] : memref<12x288xf32, #tpu.memory_space<vmem>>, vector<12x256xf32>
    %cst_20 = arith.constant dense<0.000000e+00> : vector<4x256xf32>
    %42 = tpu.matmul %40, %41, %cst_20 {dimension_numbers = #tpu.dot_dimension_numbers<[1], [0], [0], [1], [0, 0, 1, 1], [], []>} : vector<4x12xf32>, vector<12x256xf32>, vector<4x256xf32> -> vector<4x256xf32>
    %c0_21 = arith.constant 0 : index
    %c12 = arith.constant 12 : index
    %43 = vector.load %arg2[%c0_21, %c12] : memref<4x36xf32, #tpu.memory_space<vmem>>, vector<4x12xf32>
    %c0_22 = arith.constant 0 : index
    %c16_23 = arith.constant 16 : index
    %44 = vector.load %arg5[%c0_22, %c16_23] : memref<12x288xf32, #tpu.memory_space<vmem>>, vector<12x256xf32>
    %cst_24 = arith.constant dense<0.000000e+00> : vector<4x256xf32>
    %45 = tpu.matmul %43, %44, %cst_24 {dimension_numbers = #tpu.dot_dimension_numbers<[1], [0], [0], [1], [0, 0, 1, 1], [], []>} : vector<4x12xf32>, vector<12x256xf32>, vector<4x256xf32> -> vector<4x256xf32>
    %46 = arith.addf %42, %45 : vector<4x256xf32>
    %c0_25 = arith.constant 0 : index
    %c24 = arith.constant 24 : index
    %47 = vector.load %arg2[%c0_25, %c24] : memref<4x36xf32, #tpu.memory_space<vmem>>, vector<4x12xf32>
    %c0_26 = arith.constant 0 : index
    %c32_27 = arith.constant 32 : index
    %48 = vector.load %arg5[%c0_26, %c32_27] : memref<12x288xf32, #tpu.memory_space<vmem>>, vector<12x256xf32>
    %cst_28 = arith.constant dense<0.000000e+00> : vector<4x256xf32>
    %49 = tpu.matmul %47, %48, %cst_28 {dimension_numbers = #tpu.dot_dimension_numbers<[1], [0], [0], [1], [0, 0, 1, 1], [], []>} : vector<4x12xf32>, vector<12x256xf32>, vector<4x256xf32> -> vector<4x256xf32>
    %50 = arith.addf %46, %49 : vector<4x256xf32>
    %c0_29 = arith.constant 0 : index
    %c0_30 = arith.constant 0 : index
    %51 = vector.load %arg6[%c0_29, %c0_30] : memref<4x256xf32, #tpu.memory_space<vmem>>, vector<4x256xf32>
    tpu.vector_store %arg6[%c0_29, %c0_30], %50 {strides = array<i32>} : memref<4x256xf32, #tpu.memory_space<vmem>>, vector<4x256xf32>,
    %cst_31 = arith.constant dense<0.000000e+00> : vector<4xf32>
    %52 = vector.multi_reduction <add>, %50, %cst_31 [1] : vector<4x256xf32> to vector<4xf32>
    %53 = vector.shape_cast %52 : vector<4xf32> to vector<4x1xf32>
    %54 = arith.addf %38, %53 : vector<4x1xf32>
    %55 = arith.mulf %50, %50 : vector<4x256xf32>
    %cst_32 = arith.constant dense<0.000000e+00> : vector<4xf32>
    %56 = vector.multi_reduction <add>, %55, %cst_32 [1] : vector<4x256xf32> to vector<4xf32>
    %57 = vector.shape_cast %56 : vector<4xf32> to vector<4x1xf32>
    %58 = arith.addf %39, %57 : vector<4x1xf32>
    %cst_33 = arith.constant 3.906250e-03 : f32
    %59 = vector.broadcast %cst_33 : f32 to vector<4x1xf32>
    %60 = arith.mulf %54, %59 : vector<4x1xf32>
    %cst_34 = arith.constant 3.906250e-03 : f32
    %61 = vector.broadcast %cst_34 : f32 to vector<4x1xf32>
    %62 = arith.mulf %58, %61 : vector<4x1xf32>
    %63 = arith.mulf %60, %60 : vector<4x1xf32>
    %64 = arith.subf %62, %63 : vector<4x1xf32>
    %cst_35 = arith.constant 9.99999974E-6 : f32
    %65 = vector.broadcast %cst_35 : f32 to vector<4x1xf32>
    %66 = arith.addf %64, %65 : vector<4x1xf32>
    %67 = math.rsqrt %66 : vector<4x1xf32>
    %c0_36 = arith.constant 0 : index
    %c0_37 = arith.constant 0 : index
    %68 = vector.load %arg6[%c0_36, %c0_37] : memref<4x256xf32, #tpu.memory_space<vmem>>, vector<4x256xf32>
    %69 = vector.broadcast %60 : vector<4x1xf32> to vector<4x256xf32>
    %70 = arith.subf %68, %69 : vector<4x256xf32>
    %71 = vector.broadcast %67 : vector<4x1xf32> to vector<4x256xf32>
    %72 = arith.mulf %70, %71 : vector<4x256xf32>
    %cst_38 = arith.constant 0.000000e+00 : f32
    %73 = vector.broadcast %cst_38 : f32 to vector<4x256xf32>
    %74 = arith.maximumf %72, %73 : vector<4x256xf32>
    %c1_i32_39 = arith.constant 1 : i32
    %75 = tpu.dynamic_rotate %74 by %c1_i32_39 dim 1 : vector<4x256xf32>, i32 -> vector<4x256xf32>
    %c255_i32_40 = arith.constant 255 : i32
    %76 = tpu.dynamic_rotate %74 by %c255_i32_40 dim 1 : vector<4x256xf32>, i32 -> vector<4x256xf32>
    %77 = vector.shape_cast %18 : vector<1x256xi1> to vector<1x256xi1>
    %78 = vector.broadcast %77 : vector<1x256xi1> to vector<4x256xi1>
    %79 = arith.select %78, %76, %75 : vector<4x256xi1>, vector<4x256xf32>
    %80 = vector.shape_cast %20 : vector<1x256xi1> to vector<1x256xi1>
    %81 = vector.broadcast %80 : vector<1x256xi1> to vector<4x256xi1>
    %82 = arith.select %81, %75, %76 : vector<4x256xi1>, vector<4x256xf32>
    %c0_41 = arith.constant 0 : index
    %c16_42 = arith.constant 16 : index
    %83 = vector.load %arg5[%c0_41, %c16_42] : memref<12x288xf32, #tpu.memory_space<vmem>>, vector<4x256xf32>
    tpu.vector_store %arg5[%c0_41, %c16_42], %79 {strides = array<i32>} : memref<12x288xf32, #tpu.memory_space<vmem>>, vector<4x256xf32>,
    %c4_43 = arith.constant 4 : index
    %c16_44 = arith.constant 16 : index
    %84 = vector.load %arg5[%c4_43, %c16_44] : memref<12x288xf32, #tpu.memory_space<vmem>>, vector<4x256xf32>
    tpu.vector_store %arg5[%c4_43, %c16_44], %74 {strides = array<i32>} : memref<12x288xf32, #tpu.memory_space<vmem>>, vector<4x256xf32>,
    %c8_45 = arith.constant 8 : index
    %c16_46 = arith.constant 16 : index
    %85 = vector.load %arg5[%c8_45, %c16_46] : memref<12x288xf32, #tpu.memory_space<vmem>>, vector<4x256xf32>
    tpu.vector_store %arg5[%c8_45, %c16_46], %82 {strides = array<i32>} : memref<12x288xf32, #tpu.memory_space<vmem>>, vector<4x256xf32>,
    %c0_47 = arith.constant 0 : index
    %c32_48 = arith.constant 32 : index
    %86 = vector.load %arg5[%c0_47, %c32_48] : memref<12x288xf32, #tpu.memory_space<vmem>>, vector<12x16xf32>
    %c0_49 = arith.constant 0 : index
    %c0_50 = arith.constant 0 : index
    %87 = vector.load %arg5[%c0_49, %c0_50] : memref<12x288xf32, #tpu.memory_space<vmem>>, vector<12x16xf32>
    tpu.vector_store %arg5[%c0_49, %c0_50], %86 {strides = array<i32>} : memref<12x288xf32, #tpu.memory_space<vmem>>, vector<12x16xf32>,
    %c0_51 = arith.constant 0 : index
    %c240_52 = arith.constant 240 : index
    %88 = vector.load %arg5[%c0_51, %c240_52] : memref<12x288xf32, #tpu.memory_space<vmem>>, vector<12x16xf32>
    %c0_53 = arith.constant 0 : index
    %c272_54 = arith.constant 272 : index
    %89 = vector.load %arg5[%c0_53, %c272_54] : memref<12x288xf32, #tpu.memory_space<vmem>>, vector<12x16xf32>
    tpu.vector_store %arg5[%c0_53, %c272_54], %88 {strides = array<i32>} : memref<12x288xf32, #tpu.memory_space<vmem>>, vector<12x16xf32>,
    %cst_55 = arith.constant 0.000000e+00 : f32
    %90 = vector.broadcast %cst_55 : f32 to vector<4x1xf32>
    %cst_56 = arith.constant 0.000000e+00 : f32
    %91 = vector.broadcast %cst_56 : f32 to vector<4x1xf32>
    %c0_57 = arith.constant 0 : index
    %c0_58 = arith.constant 0 : index
    %92 = vector.load %arg3[%c0_57, %c0_58] : memref<4x36xf32, #tpu.memory_space<vmem>>, vector<4x12xf32>
    %c0_59 = arith.constant 0 : index
    %c0_60 = arith.constant 0 : index
    %93 = vector.load %arg5[%c0_59, %c0_60] : memref<12x288xf32, #tpu.memory_space<vmem>>, vector<12x256xf32>
    %cst_61 = arith.constant dense<0.000000e+00> : vector<4x256xf32>
    %94 = tpu.matmul %92, %93, %cst_61 {dimension_numbers = #tpu.dot_dimension_numbers<[1], [0], [0], [1], [0, 0, 1, 1], [], []>} : vector<4x12xf32>, vector<12x256xf32>, vector<4x256xf32> -> vector<4x256xf32>
    %c0_62 = arith.constant 0 : index
    %c12_63 = arith.constant 12 : index
    %95 = vector.load %arg3[%c0_62, %c12_63] : memref<4x36xf32, #tpu.memory_space<vmem>>, vector<4x12xf32>
    %c0_64 = arith.constant 0 : index
    %c16_65 = arith.constant 16 : index
    %96 = vector.load %arg5[%c0_64, %c16_65] : memref<12x288xf32, #tpu.memory_space<vmem>>, vector<12x256xf32>
    %cst_66 = arith.constant dense<0.000000e+00> : vector<4x256xf32>
    %97 = tpu.matmul %95, %96, %cst_66 {dimension_numbers = #tpu.dot_dimension_numbers<[1], [0], [0], [1], [0, 0, 1, 1], [], []>} : vector<4x12xf32>, vector<12x256xf32>, vector<4x256xf32> -> vector<4x256xf32>
    %98 = arith.addf %94, %97 : vector<4x256xf32>
    %c0_67 = arith.constant 0 : index
    %c24_68 = arith.constant 24 : index
    %99 = vector.load %arg3[%c0_67, %c24_68] : memref<4x36xf32, #tpu.memory_space<vmem>>, vector<4x12xf32>
    %c0_69 = arith.constant 0 : index
    %c32_70 = arith.constant 32 : index
    %100 = vector.load %arg5[%c0_69, %c32_70] : memref<12x288xf32, #tpu.memory_space<vmem>>, vector<12x256xf32>
    %cst_71 = arith.constant dense<0.000000e+00> : vector<4x256xf32>
    %101 = tpu.matmul %99, %100, %cst_71 {dimension_numbers = #tpu.dot_dimension_numbers<[1], [0], [0], [1], [0, 0, 1, 1], [], []>} : vector<4x12xf32>, vector<12x256xf32>, vector<4x256xf32> -> vector<4x256xf32>
    %102 = arith.addf %98, %101 : vector<4x256xf32>
    %c0_72 = arith.constant 0 : index
    %c0_73 = arith.constant 0 : index
    %103 = vector.load %arg6[%c0_72, %c0_73] : memref<4x256xf32, #tpu.memory_space<vmem>>, vector<4x256xf32>
    tpu.vector_store %arg6[%c0_72, %c0_73], %102 {strides = array<i32>} : memref<4x256xf32, #tpu.memory_space<vmem>>, vector<4x256xf32>,
    %cst_74 = arith.constant dense<0.000000e+00> : vector<4xf32>
    %104 = vector.multi_reduction <add>, %102, %cst_74 [1] : vector<4x256xf32> to vector<4xf32>
    %105 = vector.shape_cast %104 : vector<4xf32> to vector<4x1xf32>
    %106 = arith.addf %90, %105 : vector<4x1xf32>
    %107 = arith.mulf %102, %102 : vector<4x256xf32>
    %cst_75 = arith.constant dense<0.000000e+00> : vector<4xf32>
    %108 = vector.multi_reduction <add>, %107, %cst_75 [1] : vector<4x256xf32> to vector<4xf32>
    %109 = vector.shape_cast %108 : vector<4xf32> to vector<4x1xf32>
    %110 = arith.addf %91, %109 : vector<4x1xf32>
    %cst_76 = arith.constant 3.906250e-03 : f32
    %111 = vector.broadcast %cst_76 : f32 to vector<4x1xf32>
    %112 = arith.mulf %106, %111 : vector<4x1xf32>
    %cst_77 = arith.constant 3.906250e-03 : f32
    %113 = vector.broadcast %cst_77 : f32 to vector<4x1xf32>
    %114 = arith.mulf %110, %113 : vector<4x1xf32>
    %115 = arith.mulf %112, %112 : vector<4x1xf32>
    %116 = arith.subf %114, %115 : vector<4x1xf32>
    %cst_78 = arith.constant 9.99999974E-6 : f32
    %117 = vector.broadcast %cst_78 : f32 to vector<4x1xf32>
    %118 = arith.addf %116, %117 : vector<4x1xf32>
    %119 = math.rsqrt %118 : vector<4x1xf32>
    %c0_79 = arith.constant 0 : index
    %c0_80 = arith.constant 0 : index
    %120 = vector.load %arg6[%c0_79, %c0_80] : memref<4x256xf32, #tpu.memory_space<vmem>>, vector<4x256xf32>
    %121 = vector.broadcast %112 : vector<4x1xf32> to vector<4x256xf32>
    %122 = arith.subf %120, %121 : vector<4x256xf32>
    %123 = vector.broadcast %119 : vector<4x1xf32> to vector<4x256xf32>
    %124 = arith.mulf %122, %123 : vector<4x256xf32>
    %c0_81 = arith.constant 0 : index
    %c0_82 = arith.constant 0 : index
    %c0_83 = arith.constant 0 : index
    %125 = vector.load %arg1[%c0_81, %c0_82, %c0_83] : memref<1x4x256xf32, #tpu.memory_space<vmem>>, vector<1x4x256xf32>
    %126 = vector.shape_cast %125 : vector<1x4x256xf32> to vector<4x256xf32>
    %127 = arith.addf %126, %124 : vector<4x256xf32>
    %c0_84 = arith.constant 0 : index
    %c0_85 = arith.constant 0 : index
    %c0_86 = arith.constant 0 : index
    %128 = vector.load %arg4[%c0_84, %c0_85, %c0_86] : memref<1x4x256xf32, #tpu.memory_space<vmem>>, vector<1x4x256xf32>
    %129 = vector.shape_cast %128 : vector<1x4x256xf32> to vector<4x256xf32>
    %130 = vector.shape_cast %127 : vector<4x256xf32> to vector<1x4x256xf32>
    tpu.vector_store %arg4[%c0_84, %c0_85, %c0_86], %130 {strides = array<i32>} : memref<1x4x256xf32, #tpu.memory_space<vmem>>, vector<1x4x256xf32>,
    return
  }
  func.func @transform_0(%arg0: i32) -> (i32, i32, i32) {
    %c0_i32 = arith.constant 0 : i32
    %c0_i32_0 = arith.constant 0 : i32
    %c0_i32_1 = arith.constant 0 : i32
    return %arg0, %c0_i32, %c0_i32_0 : i32, i32, i32
  }
  func.func @transform_1(%arg0: i32) -> (i32, i32) {
    %c0_i32 = arith.constant 0 : i32
    %c0_i32_0 = arith.constant 0 : i32
    %c0_i32_1 = arith.constant 0 : i32
    return %c0_i32, %c0_i32_0 : i32, i32
  }
  func.func @transform_2(%arg0: i32) -> (i32, i32) {
    %c0_i32 = arith.constant 0 : i32
    %c0_i32_0 = arith.constant 0 : i32
    %c0_i32_1 = arith.constant 0 : i32
    return %c0_i32, %c0_i32_0 : i32, i32
  }
  func.func @transform_3(%arg0: i32) -> (i32, i32, i32) {
    %c0_i32 = arith.constant 0 : i32
    %c0_i32_0 = arith.constant 0 : i32
    %c0_i32_1 = arith.constant 0 : i32
    return %arg0, %c0_i32, %c0_i32_0 : i32, i32, i32
  }
}

</mosaic_0001>

<llo_original>
// kernel: tpu_custom_call.1
$region0: #{tpu_custom_call.1}
  #allocation0 [shape = 'u32[]', space=smem, size = 0x4, offset = 0x4, fixed_abs, tag = 'smem constant byte address 0x4 - core index']
  #allocation1 [shape = 'u32[144,128]{1,0:T(1,128)}', space=vmem, size = 0x12000, scoped, tag = 'internal scratch']
  #allocation2 [shape = 'f32[12,288]{1,0:T(8,128)}', space=vmem, size = 0x6000, scoped, tag = 'scratch operand']
  #allocation3 [shape = 'f32[4,256]{1,0:T(4,128)}', space=vmem, size = 0x1000, scoped, tag = 'scratch operand']
  %s0 = inlined_call_operand.hbm [shape: f32[2,4,256], index: 0, kind: input, shape index: {}]
  %s1 = inlined_call_operand.hbm [shape: f32[4,36], index: 1, kind: input, shape index: {}]
  %s2 = inlined_call_operand.hbm [shape: f32[4,36], index: 2, kind: input, shape index: {}]
  %s3 = inlined_call_operand.hbm [shape: f32[2,4,256], index: 3, kind: output, shape index: {}]
  %s4 = sld [smem:[#allocation0]]
  $region57: #{tpu_custom_call.1} parent=0
    _
  %s6 = ssub.s32 1, %s4
  %s7 = scalar_select 0, %s6, %s4
  $region1: #{tpu_custom_call.1} parent=0
    #allocation4 [shape = 'u8[8192]{0}', space=vmem, size = 0x2000, scoped, tag = 'input window, operand 0']
    #allocation5 [shape = 's32[2]{0}', space=sflag, size = 0x8, scoped, tag = 'scoped memory for tpu_custom_call.1']
    #allocation6 [shape = 's32[2]{0}', space=sflag, size = 0x8, scoped, tag = 'scoped memory for tpu_custom_call.1']
    #allocation7 [shape = 'u8[2048]{0}', space=vmem, size = 0x800, scoped, tag = 'input window, operand 1, single buffered']
    #allocation8 [shape = 's32[1]{0}', space=sflag, size = 0x4, scoped, tag = 'scoped memory for tpu_custom_call.1']
    #allocation9 [shape = 'u8[2048]{0}', space=vmem, size = 0x800, scoped, tag = 'input window, operand 2, single buffered']
    #allocation10 [shape = 'u8[8192]{0}', space=vmem, size = 0x2000, scoped, tag = 'output window, operand 0']
    %8 = vsyncpa [#allocation5], 0
    %s9 = scalar_lea.sflag [#allocation5], 1
    %10 = vsyncpa %s9, 0
    %11 = vsyncpa [#allocation8], 0
    %12 = vsyncpa [#allocation6], 0
    %s13 = scalar_lea.sflag [#allocation6], 1
    %14 = vsyncpa %s13, 0
    loop: start=0, step=1, limit=4
    $region2: #{tpu_custom_call.1} parent=1 // loop_pre_header
      _
    $region3: #{tpu_custom_call.1} parent=1 // loop_header
      %s16 = sphi 0, %s20
      %p17 = scmp.ge.s32.totalorder %s16, 4
      %s26 = sphi 0, %s28
      %s29 = sphi 0, %s26
      %s30 = sphi 0, %s29
      %s46 = sphi 0, %s30
      %s50 = sphi 0, %s50
      %s52 = sphi 0, %s50
      %s53 = sphi 0, %s52
      %s67 = sphi 0, %s53
      %s71 = sphi 0, %s71
      %s73 = sphi 0, %s71
      %s74 = sphi 0, %s73
      %s88 = sphi 0, %s74
      %s94 = sphi 0, %s96
      %s97 = sphi 0, %s94
      %s98 = sphi 0, %s97
      %s114 = sphi 0, %s98
    $region4: #{tpu_custom_call.1} parent=1 // loop_header_branch
      %19 = sbr.rel (%p17) target = $region8
    $region5: #{tpu_custom_call.1} parent=1 // loop_body
      %s21 = ssub.s32 %s16, 1
      %s22 = ssub.s32 %s16, 2
      %s23 = sadd.s32 %s16, 1
      %s24 = ssub.s32 %s16, %s23
      %p25 = scmp.eq.s32.totalorder %s24, 0
      %s27 = sadd.s32 %s26, 1
      %s28 = scalar_select %p25, %s26, %s27
      %p31 = pneg %p25
      %p32 = scmp.eq.s32.totalorder %s16, 1
      %p33 = por %p31, %p32
      %p34 = scmp.ne.s32.totalorder %s26, %s29
      %p35 = scmp.eq.s32.totalorder %s16, 0
      %p36 = por %p34, %p35
      %p37 = scmp.ne.s32.totalorder %s26, %s29
      %p38 = scmp.eq.s32.totalorder %s21, 1
      %p39 = por %p37, %p38
      %p40 = scmp.ne.s32.totalorder %s29, %s30
      %p41 = scmp.eq.s32.totalorder %s21, 0
      %p42 = por %p40, %p41
      %p43 = scmp.ne.s32.totalorder %s29, %s30
      %p44 = scmp.eq.s32.totalorder %s22, 1
      %p45 = por %p43, %p44
      %p47 = scmp.ne.s32.totalorder %s30, %s46
      %p48 = scmp.eq.s32.totalorder %s22, 0
      %p49 = por %p47, %p48
      %s51 = sadd.s32 %s50, 1
      %p54 = scmp.eq.s32.totalorder %s16, 1
      %p55 = scmp.ne.s32.totalorder %s50, %s52
      %p56 = scmp.eq.s32.totalorder %s16, 0
      %p57 = por %p55, %p56
      %p58 = scmp.ne.s32.totalorder %s50, %s52
      %p59 = scmp.eq.s32.totalorder %s21, 1
      %p60 = por %p58, %p59
      %p61 = scmp.ne.s32.totalorder %s52, %s53
      %p62 = scmp.eq.s32.totalorder %s21, 0
      %p63 = por %p61, %p62
      %p64 = scmp.ne.s32.totalorder %s52, %s53
      %p65 = scmp.eq.s32.totalorder %s22, 1
      %p66 = por %p64, %p65
      %p68 = scmp.ne.s32.totalorder %s53, %s67
      %p69 = scmp.eq.s32.totalorder %s22, 0
      %p70 = por %p68, %p69
      %s72 = sadd.s32 %s71, 1
      %p75 = scmp.eq.s32.totalorder %s16, 1
      %p76 = scmp.ne.s32.totalorder %s71, %s73
      %p77 = scmp.eq.s32.totalorder %s16, 0
      %p78 = por %p76, %p77
      %p79 = scmp.ne.s32.totalorder %s71, %s73
      %p80 = scmp.eq.s32.totalorder %s21, 1
      %p81 = por %p79, %p80
      %p82 = scmp.ne.s32.totalorder %s73, %s74
      %p83 = scmp.eq.s32.totalorder %s21, 0
      %p84 = por %p82, %p83
      %p85 = scmp.ne.s32.totalorder %s73, %s74
      %p86 = scmp.eq.s32.totalorder %s22, 1
      %p87 = por %p85, %p86
      %p89 = scmp.ne.s32.totalorder %s74, %s88
      %p90 = scmp.eq.s32.totalorder %s22, 0
      %p91 = por %p89, %p90
      %s92 = ssub.s32 %s16, %s23
      %p93 = scmp.eq.s32.totalorder %s92, 0
      %s95 = sadd.s32 %s94, 1
      %s96 = scalar_select %p93, %s94, %s95
      %p99 = pneg %p93
      %p100 = scmp.eq.s32.totalorder %s16, 1
      %p101 = por %p99, %p100
      %p102 = scmp.ne.s32.totalorder %s94, %s97
      %p103 = scmp.eq.s32.totalorder %s16, 0
      %p104 = por %p102, %p103
      %p105 = scmp.ne.s32.totalorder %s94, %s97
      %p106 = scmp.eq.s32.totalorder %s21, 1
      %p107 = por %p105, %p106
      %p108 = scmp.ne.s32.totalorder %s97, %s98
      %p109 = scmp.eq.s32.totalorder %s21, 0
      %p110 = por %p108, %p109
      %p111 = scmp.ne.s32.totalorder %s97, %s98
      %p112 = scmp.eq.s32.totalorder %s22, 1
      %p113 = por %p111, %p112
      %p115 = scmp.ne.s32.totalorder %s98, %s114
      %p116 = scmp.eq.s32.totalorder %s22, 0
      %p117 = por %p115, %p116
      %p118 = scmp.le.s32.totalorder 1, %s16
      %p119 = scmp.lt.s32.totalorder %s16, 3
      %p120 = pnand %p118, %p119
      %p121 = pneg %p120
      // Predicated region
      $region9: #{tpu_custom_call.1} parent=5 // pred_check
        _
      $region10: #{tpu_custom_call.1} parent=5 // pred_check_branch
        %123 = sbr.rel (%p120) target = $region12
      $region11: #{tpu_custom_call.1} parent=5 // pred_region
        %s124 = ssub.s32 %s16, 1
        // Predicated region
        $region13: #{tpu_custom_call.1} parent=11 // pred_check
          %p125 = pneg %p63
        $region14: #{tpu_custom_call.1} parent=11 // pred_check_branch
          %127 = sbr.rel (%p125) target = $region16
        $region15: #{tpu_custom_call.1} parent=11 // pred_region
          %s129 = ssub.s32 64, 64
          %130 = vsyncadd [#allocation8], %s129
          %s132 = sshll.u32 [#allocation7], 4
          %s133 = int_to_ptr.vmem [resolvable:$true] %s132
          %135 = dma.hbm_to_vmem [thread:$0]  %s1, 64, %s133, [#allocation8]
        $region16: #{tpu_custom_call.1} parent=11 // pred_fallthru
          _
        // Predicated region
        $region17: #{tpu_custom_call.1} parent=11 // pred_check
          %p136 = pneg %p84
        $region18: #{tpu_custom_call.1} parent=11 // pred_check_branch
          %138 = sbr.rel (%p136) target = $region20
        $region19: #{tpu_custom_call.1} parent=11 // pred_region
          %s140 = ssub.s32 64, 64
          %141 = vsyncadd [#allocation8], %s140
          %s143 = sshll.u32 [#allocation9], 4
          %s144 = int_to_ptr.vmem [resolvable:$true] %s143
          %146 = dma.hbm_to_vmem [thread:$0]  %s2, 64, %s144, [#allocation8]
        $region20: #{tpu_custom_call.1} parent=11 // pred_fallthru
          _
      $region12: #{tpu_custom_call.1} parent=5 // pred_fallthru
        _
      %p147 = scmp.lt.s32.totalorder %s16, 2
      // Predicated region
      $region21: #{tpu_custom_call.1} parent=5 // pred_check
        %p148 = pneg %p147
      $region22: #{tpu_custom_call.1} parent=5 // pred_check_branch
        %150 = sbr.rel (%p148) target = $region24
      $region23: #{tpu_custom_call.1} parent=5 // pred_region
        // Predicated region
        $region25: #{tpu_custom_call.1} parent=23 // pred_check
          %p151 = pneg %p36
        $region26: #{tpu_custom_call.1} parent=23 // pred_check_branch
          %153 = sbr.rel (%p151) target = $region28
        $region27: #{tpu_custom_call.1} parent=23 // pred_region
          %s154 = sand.u32 %s26, 1
          %s155 = scalar_lea.sflag [#allocation5], %s154
          %s156 = sand.u32 %s26, 1
          %s157 = smul.addr %s156, 8
          %s158 = scalar_lea.vmem [#allocation4], %s157
          %s160 = ssub.s32 128, 128
          %161 = vsyncadd %s155, %s160
          %s162 = smul.addr %s16, 2
          %s163 = smul.addr %s162, 64
          %s164 = scalar_lea.hbm %s0, %s163
          %s166 = sshll.u32 %s158, 4
          %s167 = int_to_ptr.vmem [resolvable:$true] %s166
          %169 = dma.hbm_to_vmem [thread:$0]  %s164, 128, %s167, %s155
        $region28: #{tpu_custom_call.1} parent=23 // pred_fallthru
          _
      $region24: #{tpu_custom_call.1} parent=5 // pred_fallthru
        _
      %p170 = scmp.le.s32.totalorder 1, %s16
      %p171 = scmp.lt.s32.totalorder %s16, 3
      %p172 = pnand %p170, %p171
      %p173 = pneg %p172
      // Predicated region
      $region29: #{tpu_custom_call.1} parent=5 // pred_check
        _
      $region30: #{tpu_custom_call.1} parent=5 // pred_check_branch
        %175 = sbr.rel (%p172) target = $region32
      $region31: #{tpu_custom_call.1} parent=5 // pred_region
        %s176 = ssub.s32 %s16, 1
        %s177 = sand.u32 %s29, 1
        %s178 = scalar_lea.sflag [#allocation5], %s177
        %s179 = sand.u32 %s29, 1
        %s180 = smul.addr %s179, 8
        %s181 = scalar_lea.vmem [#allocation4], %s180
        // Predicated region
        $region33: #{tpu_custom_call.1} parent=31 // pred_check
          %p182 = pneg %p42
        $region34: #{tpu_custom_call.1} parent=31 // pred_check_branch
          %184 = sbr.rel (%p182) target = $region36
        $region35: #{tpu_custom_call.1} parent=31 // pred_region
          %185 = dma.done %s178, 128
        $region36: #{tpu_custom_call.1} parent=31 // pred_fallthru
          _
        // Predicated region
        $region37: #{tpu_custom_call.1} parent=31 // pred_check
          %p186 = pneg %p63
        $region38: #{tpu_custom_call.1} parent=31 // pred_check_branch
          %188 = sbr.rel (%p186) target = $region40
        $region39: #{tpu_custom_call.1} parent=31 // pred_region
          %189 = dma.done [#allocation8], 64
        $region40: #{tpu_custom_call.1} parent=31 // pred_fallthru
          _
        // Predicated region
        $region41: #{tpu_custom_call.1} parent=31 // pred_check
          %p190 = pneg %p84
        $region42: #{tpu_custom_call.1} parent=31 // pred_check_branch
          %192 = sbr.rel (%p190) target = $region44
        $region43: #{tpu_custom_call.1} parent=31 // pred_region
          %193 = dma.done [#allocation8], 64
        $region44: #{tpu_custom_call.1} parent=31 // pred_fallthru
          _
        %s194 = sand.u32 %s29, 1
        %s195 = scalar_lea.sflag [#allocation5], %s194
        %s196 = sand.u32 %s29, 1
        %s197 = smul.addr %s196, 8
        %s198 = scalar_lea.vmem [#allocation4], %s197
        %p199 = pneg %p42
        %p200 = pneg %p39
        %p201 = pneg %p63
        %p202 = pneg %p60
        %p203 = pneg %p84
        %p204 = pneg %p81
        %p205 = pneg %p110
        %p206 = pneg %p107
        %s207 = sand.u32 %s97, 1
        %s208 = scalar_lea.sflag [#allocation6], %s207
        %s209 = sand.u32 %s97, 1
        %s210 = smul.addr %s209, 8
        %s211 = scalar_lea.vmem [#allocation10], %s210
        %v212 = vlaneseq
        %v213 = vand.u32 %v212, 127
        %v214 = vadd.s32 %v213, 128
        %vm215 = vcmp.lt.s32.totalorder %v213, 0
        %v216 = vsub.s32 0, %v213
        %v217 = vsel %vm215, %v216, %v213
        %v218 = vshrl.u32 %v217, 4
        %v219 = vand.u32 %v217, 15
        %v220 = vsub.s32 0, %v219
        %v221 = vsel %vm215, %v220, %v219
        %vm222 = vcmp.lt.s32.totalorder %v214, 0
        %v223 = vsub.s32 0, %v214
        %v224 = vsel %vm222, %v223, %v214
        %v225 = vshrl.u32 %v224, 4
        %v226 = vand.u32 %v224, 15
        %v227 = vsub.s32 0, %v226
        %v228 = vsel %vm222, %v227, %v226
        %vm229 = vcmp.ne.s32.totalorder %v221, 0
        %vm230 = vcmp.ne.s32.totalorder %v228, 0
        %vm231 = vcmp.lt.s32.totalorder %v221, 0
        %vm232 = vcmp.lt.s32.totalorder %v228, 0
        %vm233 = vmand %vm231, %vm229
        %vm234 = vmand %vm232, %vm230
        %v235 = vadd.s32 %v221, 16
        %v236 = vadd.s32 %v228, 16
        %v237 = vsel %vm233, %v235, %v221
        %v238 = vsel %vm234, %v236, %v228
        %vm239 = vcmp.eq.s32.totalorder %v237, 0
        %vm240 = vcmp.eq.s32.totalorder %v238, 0
        %vm241 = vcmp.eq.s32.totalorder %v237, 15
        %vm242 = vcmp.eq.s32.totalorder %v238, 15
        %v243 = vld [vmem:[%s181] sm:$0xff]
        %v245 = vcombine.high %v243, %v243
        %247 = vrot.lane.b32.xlu0 %v243, 1
        %v248 = vpop.permute.xlu0 %247
        %249 = vrot.lane.b32.xlu0 %v245, 1
        %v250 = vpop.permute.xlu0 %249
        %vm251 = vcmp.lt.s32.totalorder %v213, 1
        %v252 = vsel %vm251, %v248, %v250
        %v253 = vsel %vm251, %v250, %v248
        %254 = vrot.lane.b32.xlu0 %v243, 127
        %v255 = vpop.permute.xlu0 %254
        %256 = vrot.lane.b32.xlu0 %v245, 127
        %v257 = vpop.permute.xlu0 %256
        %vm258 = vcmp.lt.s32.totalorder %v213, 127
        %v259 = vsel %vm258, %v255, %v257
        %v260 = vsel %vm258, %v257, %v255
        %v261 = vsel %vm239, 1, 0
        %v262 = vsel %vm240, 1, 0
        %vm263 = vcmp.eq.s32.totalorder %v261, 1
        %vm264 = vcmp.eq.s32.totalorder %v262, 1
        %v265 = vsel %vm263, %v259, %v253
        %v266 = vsel %vm264, %v260, %v252
        %v267 = vsel %vm241, 1, 0
        %v268 = vsel %vm242, 1, 0
        %vm269 = vcmp.eq.s32.totalorder %v267, 1
        %vm270 = vcmp.eq.s32.totalorder %v268, 1
        %v271 = vsel %vm269, %v253, %v259
        %v272 = vsel %vm270, %v252, %v260
        %275 = vrot.lane.b32.xlu0 %v265, 16
        %v276 = vpop.permute.xlu0 %275
        %277 = vrot.lane.b32.xlu0 %v266, 16
        %v278 = vpop.permute.xlu0 %277
        %vm279 = vcmask 130048
        %v280 = vsel %vm279, %v276, %v278
        %vm284 = vcmask 1043584
        %285 = vst.msk [vmem:[#allocation2] sm:$0xf] %vm284, %v276
        %286 = vst [vmem:[#allocation2 + $0x8] sm:$0xf] %v280
        %vm287 = vcmask 125952
        %288 = vst.msk [vmem:[#allocation2 + $0x10] sm:$0xf] %vm287, %v278
        %v289 = vcombine.low %v243, %v243
        %290 = vrot.lane.b32.xlu0 %v289, 16
        %v291 = vpop.permute.xlu0 %290
        %292 = vrot.lane.b32.xlu0 %v243, 16
        %v293 = vpop.permute.xlu0 %292
        %v294 = vsel %vm279, %v291, %v293
        %vm298 = vcmask 1047684
        %299 = vst.msk [vmem:[#allocation2] sm:$0xf0] %vm298, %v291
        %300 = vst [vmem:[#allocation2 + $0x8] sm:$0xf0] %v294
        %vm301 = vcmask 130052
        %302 = vst.msk [vmem:[#allocation2 + $0x10] sm:$0xf0] %vm301, %v293
        %305 = vrot.lane.b32.xlu0 %v271, 16
        %v306 = vpop.permute.xlu0 %305
        %307 = vrot.lane.b32.xlu0 %v272, 16
        %v308 = vpop.permute.xlu0 %307
        %v309 = vsel %vm279, %v306, %v308
        %313 = vst.msk [vmem:[#allocation2 + $0x18] sm:$0xf] %vm284, %v306
        %314 = vst [vmem:[#allocation2 + $0x20] sm:$0xf] %v309
        %315 = vst.msk [vmem:[#allocation2 + $0x28] sm:$0xf] %vm287, %v308
        %v316 = vld [vmem:[#allocation2] sm:$0xff]
        %v317 = vld [vmem:[#allocation2 + $0x18] sm:$0xf]
        %320 = vrot.lane.b32.xlu0 %v316, 96
        %v321 = vpop.permute.xlu0 %320
        %322 = vrot.lane.b32.xlu0 %v317, 96
        %v323 = vpop.permute.xlu0 %322
        %326 = vst.msk [vmem:[#allocation2] sm:$0xff] %vm279, %v321
        %327 = vst.msk [vmem:[#allocation2 + $0x18] sm:$0xf] %vm287, %v323
        %v328 = vld [vmem:[#allocation2 + $0x8] sm:$0xff]
        %v329 = vld [vmem:[#allocation2 + $0x20] sm:$0xf]
        %332 = vrot.lane.b32.xlu0 %v328, 32
        %v333 = vpop.permute.xlu0 %332
        %334 = vrot.lane.b32.xlu0 %v329, 32
        %v335 = vpop.permute.xlu0 %334
        %vm338 = vcmask 261248
        %339 = vst.msk [vmem:[#allocation2 + $0x10] sm:$0xff] %vm338, %v333
        %vm340 = vcmask 257152
        %341 = vst.msk [vmem:[#allocation2 + $0x28] sm:$0xf] %vm340, %v335
        %v342 = vld [vmem:[#allocation7] sm:$0xf]
        %v343 = vld [vmem:[#allocation2] sm:$0xff]
        %v344 = vld [vmem:[#allocation2 + $0x8] sm:$0xff]
        %v345 = vld [vmem:[#allocation2 + $0x18] sm:$0xf]
        %v346 = vld [vmem:[#allocation2 + $0x20] sm:$0xf]
        %v347 = vld [vmem:[#allocation2 + $0x10] sm:$0xff]
        %v348 = vld [vmem:[#allocation2 + $0x28] sm:$0xf]
        %350 = vrot.lane.b32.xlu0 %v342, 116
        %v351 = vpop.permute.xlu0 %350
        %358 = vrot.lane.b32.xlu0 %v343, 112
        %v359 = vpop.permute.xlu0 %358
        %360 = vrot.lane.b32.xlu0 %v344, 112
        %v361 = vpop.permute.xlu0 %360
        %362 = vrot.lane.b32.xlu0 %v347, 112
        %v363 = vpop.permute.xlu0 %362
        %364 = vrot.lane.b32.xlu0 %v345, 112
        %v365 = vpop.permute.xlu0 %364
        %366 = vrot.lane.b32.xlu0 %v346, 112
        %v367 = vpop.permute.xlu0 %366
        %368 = vrot.lane.b32.xlu0 %v348, 112
        %v369 = vpop.permute.xlu0 %368
        %vm370 = vcmask 916480
        %v371 = vsel %vm370, %v359, %v361
        %v372 = vsel %vm370, %v361, %v363
        %v373 = vsel %vm370, %v365, %v367
        %v374 = vsel %vm370, %v367, %v369
        %vm377 = vcmask 97280
        %v378 = vsel %vm377, %v351, 0
        %vm380 = vcmask 1043456
        %v381 = vsel %vm380, %v373, 0
        %v383 = vsel %vm380, %v374, 0
        %385 = vmatprep.subr.mxu0 %v372
        %386 = vmatpush1.msra.mxu0 %v371
        %387 = vmatprep.subr.mxu0 %v383
        %388 = vmatpush1.msra.mxu0 %v381
        %389 = vmatprep.subr.mxu0 0.0
        %390 = vmatpush1.msra.mxu0 0.0
        %391 = vmatprep.subr.mxu0 0.0
        %392 = vmatpush1.msra.mxu0 0.0
        %393 = vmatprep.subr.mxu0 0.0
        %394 = vmatpush1.msra.mxu0 0.0
        %395 = vmatprep.subr.mxu0 0.0
        %396 = vmatpush1.msra.mxu0 0.0
        %397 = vmatprep.subr.mxu0 0.0
        %398 = vmatpush1.msra.mxu0 0.0
        %399 = vmatprep.subr.mxu0 0.0
        %400 = vmatpush1.msra.mxu0 0.0
        %401 = vmatprep.subr.mxu0 0.0
        %402 = vmatpush1.msra.mxu0 0.0
        %403 = vmatprep.subr.mxu0 0.0
        %404 = vmatpush1.msra.mxu0 0.0
        %405 = vmatprep.subr.mxu0 0.0
        %406 = vmatpush1.msra.mxu0 0.0
        %407 = vmatprep.subr.mxu0 0.0
        %408 = vmatpush1.msra.mxu0 0.0
        %409 = vmatprep.subr.mxu0 0.0
        %410 = vmatpush1.msra.mxu0 0.0
        %411 = vmatprep.subr.mxu0 0.0
        %412 = vmatpush1.msra.mxu0 0.0
        %413 = vmatprep.subr.mxu0 0.0
        %414 = vmatpush1.msra.mxu0 0.0
        %415 = vmatprep.subr.mxu0 0.0
        %416 = vmatpush1.msra.mxu0 0.0
        %417 = vmatprep.subr.mxu0 0.0
        %418 = vmatpush1.msra.mxu0 0.0
        %419 = vmatprep.subr.mxu0 0.0
        %420 = vmatpush1.msra.mxu0 0.0
        %421 = vmatprep.subr.mxu0 0.0
        %422 = vmatpush1.msra.mxu0 0.0
        %423 = vmatprep.subr.mxu0 0.0
        %424 = vmatpush1.msra.mxu0 0.0
        %425 = vmatprep.subr.mxu0 0.0
        %426 = vmatpush1.msra.mxu0 0.0
        %427 = vmatprep.subr.mxu0 0.0
        %428 = vmatpush1.msra.mxu0 0.0
        %429 = vmatprep.subr.mxu0 0.0
        %430 = vmatpush1.msra.mxu0 0.0
        %431 = vmatprep.subr.mxu0 0.0
        %432 = vmatpush1.msra.mxu0 0.0
        %433 = vmatprep.subr.mxu0 0.0
        %434 = vmatpush1.msra.mxu0 0.0
        %435 = vmatprep.subr.mxu0 0.0
        %436 = vmatpush1.msra.mxu0 0.0
        %437 = vmatprep.subr.mxu0 0.0
        %438 = vmatpush1.msra.mxu0 0.0
        %439 = vmatprep.subr.mxu0 0.0
        %440 = vmatpush1.msra.mxu0 0.0
        %441 = vmatprep.subr.mxu0 0.0
        %442 = vmatpush1.msra.mxu0 0.0
        %443 = vmatprep.subr.mxu0 0.0
        %444 = vmatpush1.msra.mxu0 0.0
        %445 = vmatprep.subr.mxu0 0.0
        %446 = vmatpush1.msra.mxu0 0.0
        %447 = vmatprep.subr.mxu0 0.0
        %448 = vmatpush1.msra.mxu0 0.0
        %449 = vmatprep.mubr.f32.mxu0 0.0
        %450 = vmatmul.mubr.f32.gmra.mrb[0].mxu0 %v378
        %v451 = vpop.f32.mrb[0].mxu0
        %v452 = vadd.f32 0.0, %v451
        %v453 = vpop.f32.mrb[0].mxu0
        %v454 = vadd.f32 0.0, %v453
        %455 = vdwg.mxu0
        %v456 = vsel %vm377, %v342, 0
        %v458 = vsel %vm380, %v345, 0
        %v460 = vsel %vm380, %v346, 0
        %462 = vmatprep.subr.mxu0 %v344
        %463 = vmatpush1.msra.mxu0 %v343
        %464 = vmatprep.subr.mxu0 %v460
        %465 = vmatpush1.msra.mxu0 %v458
        %466 = vmatprep.subr.mxu0 0.0
        %467 = vmatpush1.msra.mxu0 0.0
        %468 = vmatprep.subr.mxu0 0.0
        %469 = vmatpush1.msra.mxu0 0.0
        %470 = vmatprep.subr.mxu0 0.0
        %471 = vmatpush1.msra.mxu0 0.0
        %472 = vmatprep.subr.mxu0 0.0
        %473 = vmatpush1.msra.mxu0 0.0
        %474 = vmatprep.subr.mxu0 0.0
        %475 = vmatpush1.msra.mxu0 0.0
        %476 = vmatprep.subr.mxu0 0.0
        %477 = vmatpush1.msra.mxu0 0.0
        %478 = vmatprep.subr.mxu0 0.0
        %479 = vmatpush1.msra.mxu0 0.0
        %480 = vmatprep.subr.mxu0 0.0
        %481 = vmatpush1.msra.mxu0 0.0
        %482 = vmatprep.subr.mxu0 0.0
        %483 = vmatpush1.msra.mxu0 0.0
        %484 = vmatprep.subr.mxu0 0.0
        %485 = vmatpush1.msra.mxu0 0.0
        %486 = vmatprep.subr.mxu0 0.0
        %487 = vmatpush1.msra.mxu0 0.0
        %488 = vmatprep.subr.mxu0 0.0
        %489 = vmatpush1.msra.mxu0 0.0
        %490 = vmatprep.subr.mxu0 0.0
        %491 = vmatpush1.msra.mxu0 0.0
        %492 = vmatprep.subr.mxu0 0.0
        %493 = vmatpush1.msra.mxu0 0.0
        %494 = vmatprep.subr.mxu0 0.0
        %495 = vmatpush1.msra.mxu0 0.0
        %496 = vmatprep.subr.mxu0 0.0
        %497 = vmatpush1.msra.mxu0 0.0
        %498 = vmatprep.subr.mxu0 0.0
        %499 = vmatpush1.msra.mxu0 0.0
        %500 = vmatprep.subr.mxu0 0.0
        %501 = vmatpush1.msra.mxu0 0.0
        %502 = vmatprep.subr.mxu0 0.0
        %503 = vmatpush1.msra.mxu0 0.0
        %504 = vmatprep.subr.mxu0 0.0
        %505 = vmatpush1.msra.mxu0 0.0
        %506 = vmatprep.subr.mxu0 0.0
        %507 = vmatpush1.msra.mxu0 0.0
        %508 = vmatprep.subr.mxu0 0.0
        %509 = vmatpush1.msra.mxu0 0.0
        %510 = vmatprep.subr.mxu0 0.0
        %511 = vmatpush1.msra.mxu0 0.0
        %512 = vmatprep.subr.mxu0 0.0
        %513 = vmatpush1.msra.mxu0 0.0
        %514 = vmatprep.subr.mxu0 0.0
        %515 = vmatpush1.msra.mxu0 0.0
        %516 = vmatprep.subr.mxu0 0.0
        %517 = vmatpush1.msra.mxu0 0.0
        %518 = vmatprep.subr.mxu0 0.0
        %519 = vmatpush1.msra.mxu0 0.0
        %520 = vmatprep.subr.mxu0 0.0
        %521 = vmatpush1.msra.mxu0 0.0
        %522 = vmatprep.subr.mxu0 0.0
        %523 = vmatpush1.msra.mxu0 0.0
        %524 = vmatprep.subr.mxu0 0.0
        %525 = vmatpush1.msra.mxu0 0.0
        %526 = vmatprep.mubr.f32.mxu0 0.0
        %527 = vmatmul.mubr.f32.gmra.mrb[0].mxu0 %v456
        %v528 = vpop.f32.mrb[0].mxu0
        %v529 = vadd.f32 %v452, %v528
        %v530 = vpop.f32.mrb[0].mxu0
        %v531 = vadd.f32 %v454, %v530
        %532 = vdwg.mxu0
        %533 = vrot.lane.b32.xlu0 %v342, 104
        %v534 = vpop.permute.xlu0 %533
        %535 = vrot.lane.b32.xlu0 %v343, 96
        %v536 = vpop.permute.xlu0 %535
        %537 = vrot.lane.b32.xlu0 %v344, 96
        %v538 = vpop.permute.xlu0 %537
        %539 = vrot.lane.b32.xlu0 %v347, 96
        %v540 = vpop.permute.xlu0 %539
        %541 = vrot.lane.b32.xlu0 %v345, 96
        %v542 = vpop.permute.xlu0 %541
        %543 = vrot.lane.b32.xlu0 %v346, 96
        %v544 = vpop.permute.xlu0 %543
        %545 = vrot.lane.b32.xlu0 %v348, 96
        %v546 = vpop.permute.xlu0 %545
        %vm547 = vcmask 785408
        %v548 = vsel %vm547, %v536, %v538
        %v549 = vsel %vm547, %v538, %v540
        %v550 = vsel %vm547, %v542, %v544
        %v551 = vsel %vm547, %v544, %v546
        %v554 = vsel %vm377, %v534, 0
        %v556 = vsel %vm380, %v550, 0
        %v558 = vsel %vm380, %v551, 0
        %560 = vmatprep.subr.mxu0 %v549
        %561 = vmatpush1.msra.mxu0 %v548
        %562 = vmatprep.subr.mxu0 %v558
        %563 = vmatpush1.msra.mxu0 %v556
        %564 = vmatprep.subr.mxu0 0.0
        %565 = vmatpush1.msra.mxu0 0.0
        %566 = vmatprep.subr.mxu0 0.0
        %567 = vmatpush1.msra.mxu0 0.0
        %568 = vmatprep.subr.mxu0 0.0
        %569 = vmatpush1.msra.mxu0 0.0
        %570 = vmatprep.subr.mxu0 0.0
        %571 = vmatpush1.msra.mxu0 0.0
        %572 = vmatprep.subr.mxu0 0.0
        %573 = vmatpush1.msra.mxu0 0.0
        %574 = vmatprep.subr.mxu0 0.0
        %575 = vmatpush1.msra.mxu0 0.0
        %576 = vmatprep.subr.mxu0 0.0
        %577 = vmatpush1.msra.mxu0 0.0
        %578 = vmatprep.subr.mxu0 0.0
        %579 = vmatpush1.msra.mxu0 0.0
        %580 = vmatprep.subr.mxu0 0.0
        %581 = vmatpush1.msra.mxu0 0.0
        %582 = vmatprep.subr.mxu0 0.0
        %583 = vmatpush1.msra.mxu0 0.0
        %584 = vmatprep.subr.mxu0 0.0
        %585 = vmatpush1.msra.mxu0 0.0
        %586 = vmatprep.subr.mxu0 0.0
        %587 = vmatpush1.msra.mxu0 0.0
        %588 = vmatprep.subr.mxu0 0.0
        %589 = vmatpush1.msra.mxu0 0.0
        %590 = vmatprep.subr.mxu0 0.0
        %591 = vmatpush1.msra.mxu0 0.0
        %592 = vmatprep.subr.mxu0 0.0
        %593 = vmatpush1.msra.mxu0 0.0
        %594 = vmatprep.subr.mxu0 0.0
        %595 = vmatpush1.msra.mxu0 0.0
        %596 = vmatprep.subr.mxu0 0.0
        %597 = vmatpush1.msra.mxu0 0.0
        %598 = vmatprep.subr.mxu0 0.0
        %599 = vmatpush1.msra.mxu0 0.0
        %600 = vmatprep.subr.mxu0 0.0
        %601 = vmatpush1.msra.mxu0 0.0
        %602 = vmatprep.subr.mxu0 0.0
        %603 = vmatpush1.msra.mxu0 0.0
        %604 = vmatprep.subr.mxu0 0.0
        %605 = vmatpush1.msra.mxu0 0.0
        %606 = vmatprep.subr.mxu0 0.0
        %607 = vmatpush1.msra.mxu0 0.0
        %608 = vmatprep.subr.mxu0 0.0
        %609 = vmatpush1.msra.mxu0 0.0
        %610 = vmatprep.subr.mxu0 0.0
        %611 = vmatpush1.msra.mxu0 0.0
        %612 = vmatprep.subr.mxu0 0.0
        %613 = vmatpush1.msra.mxu0 0.0
        %614 = vmatprep.subr.mxu0 0.0
        %615 = vmatpush1.msra.mxu0 0.0
        %616 = vmatprep.subr.mxu0 0.0
        %617 = vmatpush1.msra.mxu0 0.0
        %618 = vmatprep.subr.mxu0 0.0
        %619 = vmatpush1.msra.mxu0 0.0
        %620 = vmatprep.subr.mxu0 0.0
        %621 = vmatpush1.msra.mxu0 0.0
        %622 = vmatprep.subr.mxu0 0.0
        %623 = vmatpush1.msra.mxu0 0.0
        %624 = vmatprep.mubr.f32.mxu0 0.0
        %625 = vmatmul.mubr.f32.gmra.mrb[0].mxu0 %v554
        %v626 = vpop.f32.mrb[0].mxu0
        %v627 = vadd.f32 0.0, %v626
        %v628 = vpop.f32.mrb[0].mxu0
        %v629 = vadd.f32 0.0, %v628
        %630 = vdwg.mxu0
        %v631 = vadd.f32 %v529, %v627
        %v632 = vadd.f32 %v531, %v629
        %v635 = vcombine.low %v631, %v632
        %637 = vst [vmem:[#allocation3] sm:$0xff] %v635
        %v638 = vsel %vm380, %v631, 0.0
        %v639 = vsel %vm380, %v632, 0.0
        %v640 = vadd.f32 %v638, %v639
        %641 = vadd.xlane.f32.xlu0 %v640
        %v642 = vpop.xlane.xlu0 %641
        %v643 = vadd.f32 %v642, 0.0
        %v644 = vmul.f32 %v631, %v631
        %v645 = vmul.f32 %v632, %v632
        %v646 = vsel %vm380, %v644, 0.0
        %v647 = vsel %vm380, %v645, 0.0
        %v648 = vadd.f32 %v646, %v647
        %649 = vadd.xlane.f32.xlu0 %v648
        %v650 = vpop.xlane.xlu0 %649
        %v651 = vadd.f32 %v650, 0.0
        %v652 = vmul.f32 %v643, 0.00390625
        %v653 = vmul.f32 %v651, 0.00390625
        %v654 = vmul.f32 %v652, %v652
        %v655 = vsub.f32 %v653, %v654
        %v656 = vadd.f32 %v655, 1e-05
        %v657 = vrsqrt.pop %v656
        %v658 = vld [vmem:[#allocation3] sm:$0xff]
        %v661 = vunpack.c.l.s4 839922192
        %v662 = vunpack.c.0.s8 %v661
        %v663 = vlaneseq
        %v664 = vshrl.u32 %v663, 7
        %v665 = vsub.s32 %v662, %v664
        %v666 = vrot.slane %v652, %v665
        %v668 = vsub.f32 %v658, %v666
        %v671 = vunpack.c.l.s4 839922192
        %v672 = vunpack.c.0.s8 %v671
        %v673 = vlaneseq
        %v674 = vshrl.u32 %v673, 7
        %v675 = vsub.s32 %v672, %v674
        %v676 = vrot.slane %v657, %v675
        %v678 = vmul.f32 %v668, %v676
        %v679 = vmax.f32 %v678, 0.0
        %v681 = vcombine.high %v679, %v679
        %683 = vrot.lane.b32.xlu0 %v679, 1
        %v684 = vpop.permute.xlu0 %683
        %685 = vrot.lane.b32.xlu0 %v681, 1
        %v686 = vpop.permute.xlu0 %685
        %v687 = vsel %vm251, %v684, %v686
        %v688 = vsel %vm251, %v686, %v684
        %689 = vrot.lane.b32.xlu0 %v679, 127
        %v690 = vpop.permute.xlu0 %689
        %691 = vrot.lane.b32.xlu0 %v681, 127
        %v692 = vpop.permute.xlu0 %691
        %v693 = vsel %vm258, %v690, %v692
        %v694 = vsel %vm258, %v692, %v690
        %v695 = vsel %vm263, %v693, %v688
        %v696 = vsel %vm264, %v694, %v687
        %v697 = vsel %vm269, %v688, %v693
        %v698 = vsel %vm270, %v687, %v694
        %701 = vrot.lane.b32.xlu0 %v695, 16
        %v702 = vpop.permute.xlu0 %701
        %703 = vrot.lane.b32.xlu0 %v696, 16
        %v704 = vpop.permute.xlu0 %703
        %v705 = vsel %vm279, %v702, %v704
        %709 = vst.msk [vmem:[#allocation2] sm:$0xf] %vm284, %v702
        %710 = vst [vmem:[#allocation2 + $0x8] sm:$0xf] %v705
        %711 = vst.msk [vmem:[#allocation2 + $0x10] sm:$0xf] %vm287, %v704
        %v712 = vcombine.low %v679, %v679
        %713 = vrot.lane.b32.xlu0 %v712, 16
        %v714 = vpop.permute.xlu0 %713
        %715 = vrot.lane.b32.xlu0 %v679, 16
        %v716 = vpop.permute.xlu0 %715
        %v717 = vsel %vm279, %v714, %v716
        %721 = vst.msk [vmem:[#allocation2] sm:$0xf0] %vm298, %v714
        %722 = vst [vmem:[#allocation2 + $0x8] sm:$0xf0] %v717
        %723 = vst.msk [vmem:[#allocation2 + $0x10] sm:$0xf0] %vm301, %v716
        %726 = vrot.lane.b32.xlu0 %v697, 16
        %v727 = vpop.permute.xlu0 %726
        %728 = vrot.lane.b32.xlu0 %v698, 16
        %v729 = vpop.permute.xlu0 %728
        %v730 = vsel %vm279, %v727, %v729
        %734 = vst.msk [vmem:[#allocation2 + $0x18] sm:$0xf] %vm284, %v727
        %735 = vst [vmem:[#allocation2 + $0x20] sm:$0xf] %v730
        %736 = vst.msk [vmem:[#allocation2 + $0x28] sm:$0xf] %vm287, %v729
        %v737 = vld [vmem:[#allocation2] sm:$0xff]
        %v738 = vld [vmem:[#allocation2 + $0x18] sm:$0xf]
        %741 = vrot.lane.b32.xlu0 %v737, 96
        %v742 = vpop.permute.xlu0 %741
        %743 = vrot.lane.b32.xlu0 %v738, 96
        %v744 = vpop.permute.xlu0 %743
        %747 = vst.msk [vmem:[#allocation2] sm:$0xff] %vm279, %v742
        %748 = vst.msk [vmem:[#allocation2 + $0x18] sm:$0xf] %vm287, %v744
        %v749 = vld [vmem:[#allocation2 + $0x8] sm:$0xff]
        %v750 = vld [vmem:[#allocation2 + $0x20] sm:$0xf]
        %753 = vrot.lane.b32.xlu0 %v749, 32
        %v754 = vpop.permute.xlu0 %753
        %755 = vrot.lane.b32.xlu0 %v750, 32
        %v756 = vpop.permute.xlu0 %755
        %759 = vst.msk [vmem:[#allocation2 + $0x10] sm:$0xff] %vm338, %v754
        %760 = vst.msk [vmem:[#allocation2 + $0x28] sm:$0xf] %vm340, %v756
        %v761 = vld [vmem:[#allocation9] sm:$0xf]
        %v762 = vld [vmem:[#allocation2] sm:$0xff]
        %v763 = vld [vmem:[#allocation2 + $0x8] sm:$0xff]
        %v764 = vld [vmem:[#allocation2 + $0x18] sm:$0xf]
        %v765 = vld [vmem:[#allocation2 + $0x20] sm:$0xf]
        %v766 = vld [vmem:[#allocation2 + $0x10] sm:$0xff]
        %v767 = vld [vmem:[#allocation2 + $0x28] sm:$0xf]
        %769 = vrot.lane.b32.xlu0 %v761, 116
        %v770 = vpop.permute.xlu0 %769
        %777 = vrot.lane.b32.xlu0 %v762, 112
        %v778 = vpop.permute.xlu0 %777
        %779 = vrot.lane.b32.xlu0 %v763, 112
        %v780 = vpop.permute.xlu0 %779
        %781 = vrot.lane.b32.xlu0 %v766, 112
        %v782 = vpop.permute.xlu0 %781
        %783 = vrot.lane.b32.xlu0 %v764, 112
        %v784 = vpop.permute.xlu0 %783
        %785 = vrot.lane.b32.xlu0 %v765, 112
        %v786 = vpop.permute.xlu0 %785
        %787 = vrot.lane.b32.xlu0 %v767, 112
        %v788 = vpop.permute.xlu0 %787
        %v789 = vsel %vm370, %v778, %v780
        %v790 = vsel %vm370, %v780, %v782
        %v791 = vsel %vm370, %v784, %v786
        %v792 = vsel %vm370, %v786, %v788
        %v795 = vsel %vm377, %v770, 0
        %v797 = vsel %vm380, %v791, 0
        %v799 = vsel %vm380, %v792, 0
        %801 = vmatprep.subr.mxu0 %v790
        %802 = vmatpush1.msra.mxu0 %v789
        %803 = vmatprep.subr.mxu0 %v799
        %804 = vmatpush1.msra.mxu0 %v797
        %805 = vmatprep.subr.mxu0 0.0
        %806 = vmatpush1.msra.mxu0 0.0
        %807 = vmatprep.subr.mxu0 0.0
        %808 = vmatpush1.msra.mxu0 0.0
        %809 = vmatprep.subr.mxu0 0.0
        %810 = vmatpush1.msra.mxu0 0.0
        %811 = vmatprep.subr.mxu0 0.0
        %812 = vmatpush1.msra.mxu0 0.0
        %813 = vmatprep.subr.mxu0 0.0
        %814 = vmatpush1.msra.mxu0 0.0
        %815 = vmatprep.subr.mxu0 0.0
        %816 = vmatpush1.msra.mxu0 0.0
        %817 = vmatprep.subr.mxu0 0.0
        %818 = vmatpush1.msra.mxu0 0.0
        %819 = vmatprep.subr.mxu0 0.0
        %820 = vmatpush1.msra.mxu0 0.0
        %821 = vmatprep.subr.mxu0 0.0
        %822 = vmatpush1.msra.mxu0 0.0
        %823 = vmatprep.subr.mxu0 0.0
        %824 = vmatpush1.msra.mxu0 0.0
        %825 = vmatprep.subr.mxu0 0.0
        %826 = vmatpush1.msra.mxu0 0.0
        %827 = vmatprep.subr.mxu0 0.0
        %828 = vmatpush1.msra.mxu0 0.0
        %829 = vmatprep.subr.mxu0 0.0
        %830 = vmatpush1.msra.mxu0 0.0
        %831 = vmatprep.subr.mxu0 0.0
        %832 = vmatpush1.msra.mxu0 0.0
        %833 = vmatprep.subr.mxu0 0.0
        %834 = vmatpush1.msra.mxu0 0.0
        %835 = vmatprep.subr.mxu0 0.0
        %836 = vmatpush1.msra.mxu0 0.0
        %837 = vmatprep.subr.mxu0 0.0
        %838 = vmatpush1.msra.mxu0 0.0
        %839 = vmatprep.subr.mxu0 0.0
        %840 = vmatpush1.msra.mxu0 0.0
        %841 = vmatprep.subr.mxu0 0.0
        %842 = vmatpush1.msra.mxu0 0.0
        %843 = vmatprep.subr.mxu0 0.0
        %844 = vmatpush1.msra.mxu0 0.0
        %845 = vmatprep.subr.mxu0 0.0
        %846 = vmatpush1.msra.mxu0 0.0
        %847 = vmatprep.subr.mxu0 0.0
        %848 = vmatpush1.msra.mxu0 0.0
        %849 = vmatprep.subr.mxu0 0.0
        %850 = vmatpush1.msra.mxu0 0.0
        %851 = vmatprep.subr.mxu0 0.0
        %852 = vmatpush1.msra.mxu0 0.0
        %853 = vmatprep.subr.mxu0 0.0
        %854 = vmatpush1.msra.mxu0 0.0
        %855 = vmatprep.subr.mxu0 0.0
        %856 = vmatpush1.msra.mxu0 0.0
        %857 = vmatprep.subr.mxu0 0.0
        %858 = vmatpush1.msra.mxu0 0.0
        %859 = vmatprep.subr.mxu0 0.0
        %860 = vmatpush1.msra.mxu0 0.0
        %861 = vmatprep.subr.mxu0 0.0
        %862 = vmatpush1.msra.mxu0 0.0
        %863 = vmatprep.subr.mxu0 0.0
        %864 = vmatpush1.msra.mxu0 0.0
        %865 = vmatprep.mubr.f32.mxu0 0.0
        %866 = vmatmul.mubr.f32.gmra.mrb[0].mxu0 %v795
        %v867 = vpop.f32.mrb[0].mxu0
        %v868 = vadd.f32 0.0, %v867
        %v869 = vpop.f32.mrb[0].mxu0
        %v870 = vadd.f32 0.0, %v869
        %871 = vdwg.mxu0
        %v872 = vsel %vm377, %v761, 0
        %v874 = vsel %vm380, %v764, 0
        %v876 = vsel %vm380, %v765, 0
        %878 = vmatprep.subr.mxu0 %v763
        %879 = vmatpush1.msra.mxu0 %v762
        %880 = vmatprep.subr.mxu0 %v876
        %881 = vmatpush1.msra.mxu0 %v874
        %882 = vmatprep.subr.mxu0 0.0
        %883 = vmatpush1.msra.mxu0 0.0
        %884 = vmatprep.subr.mxu0 0.0
        %885 = vmatpush1.msra.mxu0 0.0
        %886 = vmatprep.subr.mxu0 0.0
        %887 = vmatpush1.msra.mxu0 0.0
        %888 = vmatprep.subr.mxu0 0.0
        %889 = vmatpush1.msra.mxu0 0.0
        %890 = vmatprep.subr.mxu0 0.0
        %891 = vmatpush1.msra.mxu0 0.0
        %892 = vmatprep.subr.mxu0 0.0
        %893 = vmatpush1.msra.mxu0 0.0
        %894 = vmatprep.subr.mxu0 0.0
        %895 = vmatpush1.msra.mxu0 0.0
        %896 = vmatprep.subr.mxu0 0.0
        %897 = vmatpush1.msra.mxu0 0.0
        %898 = vmatprep.subr.mxu0 0.0
        %899 = vmatpush1.msra.mxu0 0.0
        %900 = vmatprep.subr.mxu0 0.0
        %901 = vmatpush1.msra.mxu0 0.0
        %902 = vmatprep.subr.mxu0 0.0
        %903 = vmatpush1.msra.mxu0 0.0
        %904 = vmatprep.subr.mxu0 0.0
        %905 = vmatpush1.msra.mxu0 0.0
        %906 = vmatprep.subr.mxu0 0.0
        %907 = vmatpush1.msra.mxu0 0.0
        %908 = vmatprep.subr.mxu0 0.0
        %909 = vmatpush1.msra.mxu0 0.0
        %910 = vmatprep.subr.mxu0 0.0
        %911 = vmatpush1.msra.mxu0 0.0
        %912 = vmatprep.subr.mxu0 0.0
        %913 = vmatpush1.msra.mxu0 0.0
        %914 = vmatprep.subr.mxu0 0.0
        %915 = vmatpush1.msra.mxu0 0.0
        %916 = vmatprep.subr.mxu0 0.0
        %917 = vmatpush1.msra.mxu0 0.0
        %918 = vmatprep.subr.mxu0 0.0
        %919 = vmatpush1.msra.mxu0 0.0
        %920 = vmatprep.subr.mxu0 0.0
        %921 = vmatpush1.msra.mxu0 0.0
        %922 = vmatprep.subr.mxu0 0.0
        %923 = vmatpush1.msra.mxu0 0.0
        %924 = vmatprep.subr.mxu0 0.0
        %925 = vmatpush1.msra.mxu0 0.0
        %926 = vmatprep.subr.mxu0 0.0
        %927 = vmatpush1.msra.mxu0 0.0
        %928 = vmatprep.subr.mxu0 0.0
        %929 = vmatpush1.msra.mxu0 0.0
        %930 = vmatprep.subr.mxu0 0.0
        %931 = vmatpush1.msra.mxu0 0.0
        %932 = vmatprep.subr.mxu0 0.0
        %933 = vmatpush1.msra.mxu0 0.0
        %934 = vmatprep.subr.mxu0 0.0
        %935 = vmatpush1.msra.mxu0 0.0
        %936 = vmatprep.subr.mxu0 0.0
        %937 = vmatpush1.msra.mxu0 0.0
        %938 = vmatprep.subr.mxu0 0.0
        %939 = vmatpush1.msra.mxu0 0.0
        %940 = vmatprep.subr.mxu0 0.0
        %941 = vmatpush1.msra.mxu0 0.0
        %942 = vmatprep.mubr.f32.mxu0 0.0
        %943 = vmatmul.mubr.f32.gmra.mrb[0].mxu0 %v872
        %v944 = vpop.f32.mrb[0].mxu0
        %v945 = vadd.f32 %v868, %v944
        %v946 = vpop.f32.mrb[0].mxu0
        %v947 = vadd.f32 %v870, %v946
        %948 = vdwg.mxu0
        %949 = vrot.lane.b32.xlu0 %v761, 104
        %v950 = vpop.permute.xlu0 %949
        %951 = vrot.lane.b32.xlu0 %v762, 96
        %v952 = vpop.permute.xlu0 %951
        %953 = vrot.lane.b32.xlu0 %v763, 96
        %v954 = vpop.permute.xlu0 %953
        %955 = vrot.lane.b32.xlu0 %v766, 96
        %v956 = vpop.permute.xlu0 %955
        %957 = vrot.lane.b32.xlu0 %v764, 96
        %v958 = vpop.permute.xlu0 %957
        %959 = vrot.lane.b32.xlu0 %v765, 96
        %v960 = vpop.permute.xlu0 %959
        %961 = vrot.lane.b32.xlu0 %v767, 96
        %v962 = vpop.permute.xlu0 %961
        %v963 = vsel %vm547, %v952, %v954
        %v964 = vsel %vm547, %v954, %v956
        %v965 = vsel %vm547, %v958, %v960
        %v966 = vsel %vm547, %v960, %v962
        %v969 = vsel %vm377, %v950, 0
        %v971 = vsel %vm380, %v965, 0
        %v973 = vsel %vm380, %v966, 0
        %975 = vmatprep.subr.mxu0 %v964
        %976 = vmatpush1.msra.mxu0 %v963
        %977 = vmatprep.subr.mxu0 %v973
        %978 = vmatpush1.msra.mxu0 %v971
        %979 = vmatprep.subr.mxu0 0.0
        %980 = vmatpush1.msra.mxu0 0.0
        %981 = vmatprep.subr.mxu0 0.0
        %982 = vmatpush1.msra.mxu0 0.0
        %983 = vmatprep.subr.mxu0 0.0
        %984 = vmatpush1.msra.mxu0 0.0
        %985 = vmatprep.subr.mxu0 0.0
        %986 = vmatpush1.msra.mxu0 0.0
        %987 = vmatprep.subr.mxu0 0.0
        %988 = vmatpush1.msra.mxu0 0.0
        %989 = vmatprep.subr.mxu0 0.0
        %990 = vmatpush1.msra.mxu0 0.0
        %991 = vmatprep.subr.mxu0 0.0
        %992 = vmatpush1.msra.mxu0 0.0
        %993 = vmatprep.subr.mxu0 0.0
        %994 = vmatpush1.msra.mxu0 0.0
        %995 = vmatprep.subr.mxu0 0.0
        %996 = vmatpush1.msra.mxu0 0.0
        %997 = vmatprep.subr.mxu0 0.0
        %998 = vmatpush1.msra.mxu0 0.0
        %999 = vmatprep.subr.mxu0 0.0
        %1000 = vmatpush1.msra.mxu0 0.0
        %1001 = vmatprep.subr.mxu0 0.0
        %1002 = vmatpush1.msra.mxu0 0.0
        %1003 = vmatprep.subr.mxu0 0.0
        %1004 = vmatpush1.msra.mxu0 0.0
        %1005 = vmatprep.subr.mxu0 0.0
        %1006 = vmatpush1.msra.mxu0 0.0
        %1007 = vmatprep.subr.mxu0 0.0
        %1008 = vmatpush1.msra.mxu0 0.0
        %1009 = vmatprep.subr.mxu0 0.0
        %1010 = vmatpush1.msra.mxu0 0.0
        %1011 = vmatprep.subr.mxu0 0.0
        %1012 = vmatpush1.msra.mxu0 0.0
        %1013 = vmatprep.subr.mxu0 0.0
        %1014 = vmatpush1.msra.mxu0 0.0
        %1015 = vmatprep.subr.mxu0 0.0
        %1016 = vmatpush1.msra.mxu0 0.0
        %1017 = vmatprep.subr.mxu0 0.0
        %1018 = vmatpush1.msra.mxu0 0.0
        %1019 = vmatprep.subr.mxu0 0.0
        %1020 = vmatpush1.msra.mxu0 0.0
        %1021 = vmatprep.subr.mxu0 0.0
        %1022 = vmatpush1.msra.mxu0 0.0
        %1023 = vmatprep.subr.mxu0 0.0
        %1024 = vmatpush1.msra.mxu0 0.0
        %1025 = vmatprep.subr.mxu0 0.0
        %1026 = vmatpush1.msra.mxu0 0.0
        %1027 = vmatprep.subr.mxu0 0.0
        %1028 = vmatpush1.msra.mxu0 0.0
        %1029 = vmatprep.subr.mxu0 0.0
        %1030 = vmatpush1.msra.mxu0 0.0
        %1031 = vmatprep.subr.mxu0 0.0
        %1032 = vmatpush1.msra.mxu0 0.0
        %1033 = vmatprep.subr.mxu0 0.0
        %1034 = vmatpush1.msra.mxu0 0.0
        %1035 = vmatprep.subr.mxu0 0.0
        %1036 = vmatpush1.msra.mxu0 0.0
        %1037 = vmatprep.subr.mxu0 0.0
        %1038 = vmatpush1.msra.mxu0 0.0
        %1039 = vmatprep.mubr.f32.mxu0 0.0
        %1040 = vmatmul.mubr.f32.gmra.mrb[0].mxu0 %v969
        %v1041 = vpop.f32.mrb[0].mxu0
        %v1042 = vadd.f32 0.0, %v1041
        %v1043 = vpop.f32.mrb[0].mxu0
        %v1044 = vadd.f32 0.0, %v1043
        %1045 = vdwg.mxu0
        %v1046 = vadd.f32 %v945, %v1042
        %v1047 = vadd.f32 %v947, %v1044
        %v1050 = vcombine.low %v1046, %v1047
        %1052 = vst [vmem:[#allocation3] sm:$0xff] %v1050
        %v1053 = vsel %vm380, %v1046, 0.0
        %v1054 = vsel %vm380, %v1047, 0.0
        %v1055 = vadd.f32 %v1053, %v1054
        %1056 = vadd.xlane.f32.xlu0 %v1055
        %v1057 = vpop.xlane.xlu0 %1056
        %v1058 = vadd.f32 %v1057, 0.0
        %v1059 = vmul.f32 %v1046, %v1046
        %v1060 = vmul.f32 %v1047, %v1047
        %v1061 = vsel %vm380, %v1059, 0.0
        %v1062 = vsel %vm380, %v1060, 0.0
        %v1063 = vadd.f32 %v1061, %v1062
        %1064 = vadd.xlane.f32.xlu0 %v1063
        %v1065 = vpop.xlane.xlu0 %1064
        %v1066 = vadd.f32 %v1065, 0.0
        %v1067 = vmul.f32 %v1058, 0.00390625
        %v1068 = vmul.f32 %v1066, 0.00390625
        %v1069 = vmul.f32 %v1067, %v1067
        %v1070 = vsub.f32 %v1068, %v1069
        %v1071 = vadd.f32 %v1070, 1e-05
        %v1072 = vrsqrt.pop %v1071
        %v1073 = vld [vmem:[#allocation3] sm:$0xff]
        %v1076 = vunpack.c.l.s4 839922192
        %v1077 = vunpack.c.0.s8 %v1076
        %v1078 = vlaneseq
        %v1079 = vshrl.u32 %v1078, 7
        %v1080 = vsub.s32 %v1077, %v1079
        %v1081 = vrot.slane %v1067, %v1080
        %v1083 = vsub.f32 %v1073, %v1081
        %v1086 = vunpack.c.l.s4 839922192
        %v1087 = vunpack.c.0.s8 %v1086
        %v1088 = vlaneseq
        %v1089 = vshrl.u32 %v1088, 7
        %v1090 = vsub.s32 %v1087, %v1089
        %v1091 = vrot.slane %v1072, %v1090
        %v1093 = vmul.f32 %v1083, %v1091
        %v1094 = vld [vmem:[%s181] sm:$0xff]
        %v1095 = vadd.f32 %v1094, %v1093
        %1096 = vst [vmem:[%s211] sm:$0xff] %v1095
        %s1097 = sand.u32 %s97, 1
        %s1098 = scalar_lea.sflag [#allocation6], %s1097
        %s1099 = sand.u32 %s97, 1
        %s1100 = smul.addr %s1099, 8
        %s1101 = scalar_lea.vmem [#allocation10], %s1100
        // Predicated region
        $region45: #{tpu_custom_call.1} parent=31 // pred_check
          %p1102 = pneg %p107
        $region46: #{tpu_custom_call.1} parent=31 // pred_check_branch
          %1104 = sbr.rel (%p1102) target = $region48
        $region47: #{tpu_custom_call.1} parent=31 // pred_region
          %s1106 = ssub.s32 128, 128
          %1107 = vsyncadd %s1098, %s1106
          %s1108 = smul.addr %s21, 2
          %s1109 = smul.addr %s1108, 64
          %s1110 = scalar_lea.hbm %s3, %s1109
          %s1112 = sshll.u32 %s1101, 4
          %s1113 = int_to_ptr.vmem [resolvable:$true] %s1112
          %1115 = dma.vmem_to_hbm [thread:$0]  %s1113, 128, %s1110, %s1098
        $region48: #{tpu_custom_call.1} parent=31 // pred_fallthru
          _
      $region32: #{tpu_custom_call.1} parent=5 // pred_fallthru
        _
      %p1116 = scmp.le.s32.totalorder 2, %s16
      // Predicated region
      $region49: #{tpu_custom_call.1} parent=5 // pred_check
        %p1117 = pneg %p1116
      $region50: #{tpu_custom_call.1} parent=5 // pred_check_branch
        %1119 = sbr.rel (%p1117) target = $region52
      $region51: #{tpu_custom_call.1} parent=5 // pred_region
        %s1120 = ssub.s32 %s16, 2
        // Predicated region
        $region53: #{tpu_custom_call.1} parent=51 // pred_check
          %p1121 = pneg %p113
        $region54: #{tpu_custom_call.1} parent=51 // pred_check_branch
          %1123 = sbr.rel (%p1121) target = $region56
        $region55: #{tpu_custom_call.1} parent=51 // pred_region
          %s1124 = sand.u32 %s98, 1
          %s1125 = scalar_lea.sflag [#allocation6], %s1124
          %s1126 = sand.u32 %s98, 1
          %s1127 = smul.addr %s1126, 8
          %s1128 = scalar_lea.vmem [#allocation10], %s1127
          %1129 = dma.done %s1125, 128
        $region56: #{tpu_custom_call.1} parent=51 // pred_fallthru
          _
      $region52: #{tpu_custom_call.1} parent=5 // pred_fallthru
        _
    $region6: #{tpu_custom_call.1} parent=1 // loop_footer
      %s20 = sadd.s32 1, %s16
    $region7: #{tpu_custom_call.1} parent=1 // loop_footer_branch
      %15 = sbr.rel target = $region3
    $region8: #{tpu_custom_call.1} parent=1 // loop_exit
      _
    %1130 = vsyncpa [#allocation5], 1
    %s1131 = scalar_lea.sflag [#allocation5], 1
    %1132 = vsyncpa %s1131, 1
    %1133 = vsyncpa [#allocation8], 1
    %1134 = vsyncpa [#allocation6], 1
    %s1135 = scalar_lea.sflag [#allocation6], 1
    %1136 = vsyncpa %s1135, 1

</llo_original>
